<compile_context>
chip_gen: v7x
topology: tpu7x:2x2x1
jax: 0.10.0
libtpu: 0.0.40
codegen_flags: <defaults>
</compile_context>

<pallas_src>
import functools

import jax
import jax.numpy as jnp
from jax import lax
from jax.experimental import pallas as pl
from jax.experimental.pallas import tpu as pltpu

NUM_LABELS = 128   # static label domain
CHUNK = 512        # pixels per inner-loop step (multiple of 128)


def _edge_loss_kernel(pred_ref, edge_ref, out_ref, seg_ref, lse_ref, *,
                      delta, num_labels, chunk, n_chunks, edge_label, ignore_id):
    # Hoisted loop invariant (JAX does not CSE broadcast_in_dim).
    lbl_iota = lax.broadcasted_iota(jnp.int32, (num_labels, chunk), 0)
    unroll = n_chunks <= 8

    seg_ref[...] = jnp.zeros_like(seg_ref)

    # ---- phase 1: per-chunk softmax + segmented sums ----------------------
    @pl.loop(0, n_chunks, unroll=unroll)
    def _(ci):
        start = pl.multiple_of(ci * chunk, 128)
        logits = pred_ref[:, pl.ds(start, chunk)]                 # (C, chunk)
        m = jnp.max(logits, axis=0, keepdims=True)                # (1, chunk)
        e = jnp.exp(logits - m)
        s = jnp.sum(e, axis=0, keepdims=True)                     # (1, chunk)
        lse_ref[:, pl.ds(start, chunk)] = m + jnp.log(s)          # cache normalizer
        probs = e / s                                             # (C, chunk)

        edge_c = edge_ref[:, pl.ds(start, chunk)]                 # (1, chunk) i32
        onehot = (lbl_iota == edge_c).astype(jnp.float32)         # (L, chunk)
        seg_ref[...] += lax.dot_general(                          # (C, L)
            probs, onehot, (((1,), (1,)), ((), ())),
            preferred_element_type=jnp.float32)

    # ---- per-instance means ------------------------------------------------
    seg = seg_ref[...]                                            # (C, L)
    # softmax columns sum to 1, so per-label pixel counts == channel-sum of seg
    # (exact up to f32 rounding); no separate counts matmul needed.
    counts = jnp.sum(seg, axis=0, keepdims=True)                  # (1, L)
    mu = seg / jnp.maximum(counts, 1.0)                           # (C, L)

    # ---- phase 2: gather mu, distance, masked reduction --------------------
    def body(ci, carry):
        num_acc, den_acc = carry                                  # (1, chunk) each
        start = pl.multiple_of(ci * chunk, 128)
        logits = pred_ref[:, pl.ds(start, chunk)]                 # (C, chunk)
        lse = lse_ref[:, pl.ds(start, chunk)]                     # (1, chunk)
        probs = jnp.exp(logits - lse)                             # recomputed softmax
        edge_c = edge_ref[:, pl.ds(start, chunk)]                 # (1, chunk)
        onehot = (lbl_iota == edge_c).astype(jnp.float32)         # (L, chunk)
        mu_expand = lax.dot_general(                              # (C, chunk)
            mu, onehot, (((1,), (0,)), ((), ())),
            preferred_element_type=jnp.float32)
        dist = jnp.sum(jnp.abs(probs - mu_expand), axis=0, keepdims=True)
        dist = jnp.maximum(dist - delta, 0.0)
        mask = jnp.logical_and(edge_c != edge_label, edge_c != ignore_id)
        mask = mask.astype(jnp.float32)
        return num_acc + dist * mask, den_acc + mask

    zero = jnp.zeros((1, chunk), jnp.float32)
    num_vec, den_vec = lax.fori_loop(0, n_chunks, body, (zero, zero),
                                     unroll=unroll)
    l_var = jnp.sum(num_vec) / (jnp.sum(den_vec) + 1e-5)
    out_ref[...] = jnp.full((1, 1, 128), l_var, dtype=jnp.float32)
    # TODO(synk): edge_balance=True branch (per-instance averaging over
    # unique_labels != {0, 255}) is not implemented; default path only.


def edge_loss_discriminate(pred_sg_up, edge_v, edge_label, *, delta=0.1,
                           num_labels=NUM_LABELS, chunk=CHUNK):
    B, C, H, W = pred_sg_up.shape
    N = H * W
    lane = 128
    n_lane = ((N + lane - 1) // lane) * lane
    chunk = max(lane, min(chunk, n_lane))       # multiple of 128, capped at image
    n_chunks = -(-N // chunk)
    n_pad = n_chunks * chunk

    ignore_id = num_labels - 1                  # 255 "ignore" bucket after remap
    el = ignore_id if int(edge_label) == 255 else int(edge_label)

    pred = pred_sg_up.reshape(B, C, N).astype(jnp.float32)
    edge = edge_v.reshape(B, 1, N).astype(jnp.int32)
    # Remap 255 into the last bucket of the reduced label domain.
    # Precondition: real instance ids lie in [0, num_labels - 2].
    edge = jnp.where(edge == 255, ignore_id, edge)
    if n_pad > N:
        pred = jnp.pad(pred, ((0, 0), (0, 0), (0, n_pad - N)))
        edge = jnp.pad(edge, ((0, 0), (0, 0), (0, n_pad - N)),
                       constant_values=ignore_id)   # padding is masked out

    kernel = functools.partial(
        _edge_loss_kernel, delta=delta, num_labels=num_labels, chunk=chunk,
        n_chunks=n_chunks, edge_label=el, ignore_id=ignore_id)

    out = pl.pallas_call(
        kernel,
        out_shape=jax.ShapeDtypeStruct((B, 1, 128), jnp.float32),
        grid_spec=pltpu.PrefetchScalarGridSpec(
            num_scalar_prefetch=0,
            grid=(B,),
            in_specs=[
                pl.BlockSpec((None, C, n_pad), lambda i: (i, 0, 0)),
                pl.BlockSpec((None, 1, n_pad), lambda i: (i, 0, 0)),
            ],
            out_specs=pl.BlockSpec((1, 1, 128), lambda i: (i, 0, 0)),
            scratch_shapes=[
                pltpu.VMEM((C, num_labels), jnp.float32),   # seg_sum accumulator
                pltpu.VMEM((1, n_pad), jnp.float32),        # cached log-sum-exp
            ],
        ),
        compiler_params=pltpu.CompilerParams(
            dimension_semantics=("parallel",),          # batch -> both TCs on v7x
            vmem_limit_bytes=48 * 1024 * 1024),
    )(pred, edge)
    # TODO(synk): for very large H*W the whole-image pred block should itself be
    # tiled over a second grid axis; current sizing targets moderate images.

    per_batch = out[:, 0, 0]                    # (B,)
    return jnp.mean(per_batch)                  # var_term / batch_size


def edge_loss_reference(pred_sg_up, edge_v, edge_label, *, delta=0.1):
    """Pure-JAX reference mirroring the PyTorch forward semantics."""
    B, C, H, W = pred_sg_up.shape
    N = H * W
    pred = jax.nn.softmax(pred_sg_up.reshape(B, C, N).astype(jnp.float32), axis=1)
    edge = edge_v.reshape(B, N).astype(jnp.int32)
    losses = []
    for i in range(B):
        seg_sum = jax.ops.segment_sum(pred[i].T, edge[i], num_segments=256).T
        counts = jax.ops.segment_sum(jnp.ones((N,), jnp.float32), edge[i],
                                     num_segments=256)
        mu = seg_sum / jnp.maximum(counts, 1.0)
        mu_expand = mu[:, edge[i]]
        dist = jnp.sum(jnp.abs(pred[i] - mu_expand), axis=0)
        dist = jnp.maximum(dist - delta, 0.0)
        mask = ((edge[i] != edge_label) & (edge[i] != 255)).astype(jnp.float32)
        losses.append(jnp.sum(dist * mask) / (jnp.sum(mask) + 1e-5))
    return jnp.mean(jnp.stack(losses))


if __name__ == "__main__":
    key = jax.random.PRNGKey(0)
    k1, k2 = jax.random.split(key)

    B, C, H, W = 2, 4, 16, 16
    pred_sg_up = jax.random.normal(k1, (B, C, H, W), dtype=jnp.float32)
    # integer edge labels in {0, 1, 2, 3, 255} (255 = ignore)
    raw = jax.random.randint(k2, (B, H, W), 0, 5, dtype=jnp.int32)
    edge_v = jnp.where(raw == 4, 255, raw).astype(jnp.int32)
    edge_label = 0

    loss = edge_loss_discriminate(pred_sg_up, edge_v, edge_label, delta=0.1)
    loss = jax.block_until_ready(loss)

    ref = edge_loss_reference(pred_sg_up, edge_v, edge_label, delta=0.1)
    ref = jax.block_until_ready(ref)

    assert jnp.allclose(loss, ref, rtol=1e-4, atol=1e-5), (loss, ref)
    print("KERNEL_OK")
</pallas_src>

<mosaic_0001>
module attributes {stable_mosaic.version = 11 : i64} {
  func.func @_edge_loss_kernel(%arg0: i32, %arg1: memref<1x4x256xf32, #tpu.memory_space<vmem>>, %arg2: memref<1x1x256xi32, #tpu.memory_space<vmem>>, %arg3: memref<1x1x128xf32, #tpu.memory_space<vmem>>, %arg4: memref<4x128xf32, #tpu.memory_space<vmem>>, %arg5: memref<1x256xf32, #tpu.memory_space<vmem>>) attributes {dimension_semantics = [#tpu.dimension_semantics<parallel>], iteration_bounds = array<i64: 2>, scalar_prefetch = 0 : i64, scratch_operands = 2 : i64, tpu.core_type = #tpu.core_type<tc>, window_params = [{transform_indices = @transform_0, window_bounds = array<i64: 1, 4, 256>}, {transform_indices = @transform_1, window_bounds = array<i64: 1, 1, 256>}, {transform_indices = @transform_2, window_bounds = array<i64: 1, 1, 128>}]} {
    %0 = tpu.iota {dimensions = array<i32: 0>} : vector<128x256xi32>
    %cst = arith.constant 0.000000e+00 : f32
    %1 = vector.broadcast %cst : f32 to vector<4x128xf32>
    %c0 = arith.constant 0 : index
    %c0_0 = arith.constant 0 : index
    %2 = vector.load %arg4[%c0, %c0_0] : memref<4x128xf32, #tpu.memory_space<vmem>>, vector<4x128xf32>
    tpu.vector_store %arg4[%c0, %c0_0], %1 {strides = array<i32>} : memref<4x128xf32, #tpu.memory_space<vmem>>, vector<4x128xf32>,
    %c0_i32 = arith.constant 0 : i32
    %c1_i32 = arith.constant 1 : i32
    %3 = arith.muli %c0_i32, %c1_i32 : i32
    %c0_i32_1 = arith.constant 0 : i32
    %4 = arith.addi %c0_i32_1, %3 : i32
    %c256_i32 = arith.constant 256 : i32
    %5 = arith.muli %4, %c256_i32 : i32
    %6 = tpu.assume_multiple %5, 128 : i32
    %c0_2 = arith.constant 0 : index
    %c0_3 = arith.constant 0 : index
    %7 = arith.index_cast %6 : i32 to index
    %8 = vector.load %arg1[%c0_2, %c0_3, %7] : memref<1x4x256xf32, #tpu.memory_space<vmem>>, vector<1x4x256xf32>
    %9 = vector.shape_cast %8 : vector<1x4x256xf32> to vector<4x256xf32>
    %cst_4 = arith.constant dense<0xFF800000> : vector<256xf32>
    %10 = vector.multi_reduction <maximumf>, %9, %cst_4 [0] : vector<4x256xf32> to vector<256xf32>
    %11 = vector.shape_cast %10 : vector<256xf32> to vector<1x256xf32>
    %12 = vector.broadcast %11 : vector<1x256xf32> to vector<4x256xf32>
    %13 = arith.subf %9, %12 : vector<4x256xf32>
    %14 = math.exp %13 : vector<4x256xf32>
    %cst_5 = arith.constant dense<0.000000e+00> : vector<256xf32>
    %15 = vector.multi_reduction <add>, %14, %cst_5 [0] : vector<4x256xf32> to vector<256xf32>
    %16 = vector.shape_cast %15 : vector<256xf32> to vector<1x256xf32>
    %17 = math.log %16 : vector<1x256xf32>
    %18 = arith.addf %11, %17 : vector<1x256xf32>
    %c0_6 = arith.constant 0 : index
    %19 = arith.index_cast %6 : i32 to index
    %20 = vector.load %arg5[%c0_6, %19] : memref<1x256xf32, #tpu.memory_space<vmem>>, vector<1x256xf32>
    tpu.vector_store %arg5[%c0_6, %19], %18 {strides = array<i32>} : memref<1x256xf32, #tpu.memory_space<vmem>>, vector<1x256xf32>,
    %21 = vector.broadcast %16 : vector<1x256xf32> to vector<4x256xf32>
    %22 = arith.divf %14, %21 : vector<4x256xf32>
    %c0_7 = arith.constant 0 : index
    %c0_8 = arith.constant 0 : index
    %23 = arith.index_cast %6 : i32 to index
    %24 = vector.load %arg2[%c0_7, %c0_8, %23] : memref<1x1x256xi32, #tpu.memory_space<vmem>>, vector<1x1x256xi32>
    %25 = vector.shape_cast %24 : vector<1x1x256xi32> to vector<1x256xi32>
    %26 = vector.broadcast %25 : vector<1x256xi32> to vector<128x256xi32>
    %27 = arith.cmpi eq, %0, %26 : vector<128x256xi32>
    %28 = arith.extui %27 : vector<128x256xi1> to vector<128x256xi32>
    %29 = arith.sitofp %28 : vector<128x256xi32> to vector<128x256xf32>
    %c0_9 = arith.constant 0 : index
    %c0_10 = arith.constant 0 : index
    %30 = vector.load %arg4[%c0_9, %c0_10] : memref<4x128xf32, #tpu.memory_space<vmem>>, vector<4x128xf32>
    %cst_11 = arith.constant dense<0.000000e+00> : vector<4x128xf32>
    %31 = tpu.matmul %22, %29, %cst_11 {dimension_numbers = #tpu.dot_dimension_numbers<[1], [1], [0], [0], [0, 0, 1, 0], [], []>} : vector<4x256xf32>, vector<128x256xf32>, vector<4x128xf32> -> vector<4x128xf32>
    %32 = arith.addf %30, %31 : vector<4x128xf32>
    %c0_12 = arith.constant 0 : index
    %c0_13 = arith.constant 0 : index
    %33 = vector.load %arg4[%c0_12, %c0_13] : memref<4x128xf32, #tpu.memory_space<vmem>>, vector<4x128xf32>
    tpu.vector_store %arg4[%c0_12, %c0_13], %32 {strides = array<i32>} : memref<4x128xf32, #tpu.memory_space<vmem>>, vector<4x128xf32>,
    %c1_i32_14 = arith.constant 1 : i32
    %c0_15 = arith.constant 0 : index
    %c0_16 = arith.constant 0 : index
    %34 = vector.load %arg4[%c0_15, %c0_16] : memref<4x128xf32, #tpu.memory_space<vmem>>, vector<4x128xf32>
    %cst_17 = arith.constant dense<0.000000e+00> : vector<128xf32>
    %35 = vector.multi_reduction <add>, %34, %cst_17 [0] : vector<4x128xf32> to vector<128xf32>
    %36 = vector.shape_cast %35 : vector<128xf32> to vector<1x128xf32>
    %cst_18 = arith.constant 1.000000e+00 : f32
    %37 = vector.broadcast %cst_18 : f32 to vector<1x128xf32>
    %38 = arith.maximumf %36, %37 : vector<1x128xf32>
    %39 = vector.broadcast %38 : vector<1x128xf32> to vector<4x128xf32>
    %40 = arith.divf %34, %39 : vector<4x128xf32>
    %cst_19 = arith.constant 0.000000e+00 : f32
    %41 = vector.broadcast %cst_19 : f32 to vector<1x256xf32>
    %c0_i32_20 = arith.constant 0 : i32
    %c256_i32_21 = arith.constant 256 : i32
    %42 = arith.muli %c0_i32_20, %c256_i32_21 : i32
    %43 = tpu.assume_multiple %42, 128 : i32
    %c0_22 = arith.constant 0 : index
    %c0_23 = arith.constant 0 : index
    %44 = arith.index_cast %43 : i32 to index
    %45 = vector.load %arg1[%c0_22, %c0_23, %44] : memref<1x4x256xf32, #tpu.memory_space<vmem>>, vector<1x4x256xf32>
    %46 = vector.shape_cast %45 : vector<1x4x256xf32> to vector<4x256xf32>
    %c0_24 = arith.constant 0 : index
    %47 = arith.index_cast %43 : i32 to index
    %48 = vector.load %arg5[%c0_24, %47] : memref<1x256xf32, #tpu.memory_space<vmem>>, vector<1x256xf32>
    %49 = vector.broadcast %48 : vector<1x256xf32> to vector<4x256xf32>
    %50 = arith.subf %46, %49 : vector<4x256xf32>
    %51 = math.exp %50 : vector<4x256xf32>
    %c0_25 = arith.constant 0 : index
    %c0_26 = arith.constant 0 : index
    %52 = arith.index_cast %43 : i32 to index
    %53 = vector.load %arg2[%c0_25, %c0_26, %52] : memref<1x1x256xi32, #tpu.memory_space<vmem>>, vector<1x1x256xi32>
    %54 = vector.shape_cast %53 : vector<1x1x256xi32> to vector<1x256xi32>
    %55 = vector.broadcast %54 : vector<1x256xi32> to vector<128x256xi32>
    %56 = arith.cmpi eq, %0, %55 : vector<128x256xi32>
    %57 = arith.extui %56 : vector<128x256xi1> to vector<128x256xi32>
    %58 = arith.sitofp %57 : vector<128x256xi32> to vector<128x256xf32>
    %cst_27 = arith.constant dense<0.000000e+00> : vector<4x256xf32>
    %59 = tpu.matmul %40, %58, %cst_27 {dimension_numbers = #tpu.dot_dimension_numbers<[1], [0], [0], [1], [0, 0, 1, 1], [], []>} : vector<4x128xf32>, vector<128x256xf32>, vector<4x256xf32> -> vector<4x256xf32>
    %60 = arith.subf %51, %59 : vector<4x256xf32>
    %61 = math.absf %60 : vector<4x256xf32>
    %cst_28 = arith.constant dense<0.000000e+00> : vector<256xf32>
    %62 = vector.multi_reduction <add>, %61, %cst_28 [0] : vector<4x256xf32> to vector<256xf32>
    %63 = vector.shape_cast %62 : vector<256xf32> to vector<1x256xf32>
    %cst_29 = arith.constant 1.000000e-01 : f32
    %64 = vector.broadcast %cst_29 : f32 to vector<1x256xf32>
    %65 = arith.subf %63, %64 : vector<1x256xf32>
    %cst_30 = arith.constant 0.000000e+00 : f32
    %66 = vector.broadcast %cst_30 : f32 to vector<1x256xf32>
    %67 = arith.maximumf %65, %66 : vector<1x256xf32>
    %c0_i32_31 = arith.constant 0 : i32
    %68 = vector.broadcast %c0_i32_31 : i32 to vector<1x256xi32>
    %69 = arith.cmpi ne, %54, %68 : vector<1x256xi32>
    %c127_i32 = arith.constant 127 : i32
    %70 = vector.broadcast %c127_i32 : i32 to vector<1x256xi32>
    %71 = arith.cmpi ne, %54, %70 : vector<1x256xi32>
    %72 = arith.andi %69, %71 : vector<1x256xi1>
    %73 = arith.extui %72 : vector<1x256xi1> to vector<1x256xi32>
    %74 = arith.sitofp %73 : vector<1x256xi32> to vector<1x256xf32>
    %75 = arith.mulf %67, %74 : vector<1x256xf32>
    %76 = arith.addf %41, %75 : vector<1x256xf32>
    %77 = arith.addf %41, %74 : vector<1x256xf32>
    %c1_i32_32 = arith.constant 1 : i32
    %78 = vector.shape_cast %76 : vector<1x256xf32> to vector<1x1x256xf32>
    %cst_33 = arith.constant dense<0.000000e+00> : vector<1xf32>
    %79 = vector.multi_reduction <add>, %78, %cst_33 [1, 2] : vector<1x1x256xf32> to vector<1xf32>
    %80 = vector.shape_cast %79 : vector<1xf32> to vector<1x1x1xf32>
    %81 = vector.extract %80[0, 0, 0] : f32 from vector<1x1x1xf32>
    %82 = vector.shape_cast %77 : vector<1x256xf32> to vector<1x1x256xf32>
    %cst_34 = arith.constant dense<0.000000e+00> : vector<1xf32>
    %83 = vector.multi_reduction <add>, %82, %cst_34 [1, 2] : vector<1x1x256xf32> to vector<1xf32>
    %84 = vector.shape_cast %83 : vector<1xf32> to vector<1x1x1xf32>
    %85 = vector.extract %84[0, 0, 0] : f32 from vector<1x1x1xf32>
    %cst_35 = arith.constant 9.99999974E-6 : f32
    %86 = arith.addf %85, %cst_35 : f32
    %87 = arith.divf %81, %86 : f32
    %88 = vector.broadcast %87 : f32 to vector<1x1x128xf32>
    %c0_36 = arith.constant 0 : index
    %c0_37 = arith.constant 0 : index
    %c0_38 = arith.constant 0 : index
    %89 = vector.load %arg3[%c0_36, %c0_37, %c0_38] : memref<1x1x128xf32, #tpu.memory_space<vmem>>, vector<1x1x128xf32>
    tpu.vector_store %arg3[%c0_36, %c0_37, %c0_38], %88 {strides = array<i32>} : memref<1x1x128xf32, #tpu.memory_space<vmem>>, vector<1x1x128xf32>,
    return
  }
  func.func @transform_0(%arg0: i32) -> (i32, i32, i32) {
    %c0_i32 = arith.constant 0 : i32
    %c0_i32_0 = arith.constant 0 : i32
    %c0_i32_1 = arith.constant 0 : i32
    return %arg0, %c0_i32, %c0_i32_0 : i32, i32, i32
  }
  func.func @transform_1(%arg0: i32) -> (i32, i32, i32) {
    %c0_i32 = arith.constant 0 : i32
    %c0_i32_0 = arith.constant 0 : i32
    %c0_i32_1 = arith.constant 0 : i32
    return %arg0, %c0_i32, %c0_i32_0 : i32, i32, i32
  }
  func.func @transform_2(%arg0: i32) -> (i32, i32, i32) {
    %c0_i32 = arith.constant 0 : i32
    %c0_i32_0 = arith.constant 0 : i32
    %c0_i32_1 = arith.constant 0 : i32
    return %arg0, %c0_i32, %c0_i32_0 : i32, i32, i32
  }
}

</mosaic_0001>

<llo_original>
// kernel: tpu_custom_call.1
$region0: #{tpu_custom_call.1}
  #allocation0 [shape = 'u32[]', space=smem, size = 0x4, offset = 0x4, fixed_abs, tag = 'smem constant byte address 0x4 - core index']
  #allocation1 [shape = 'u32[144,128]{1,0:T(1,128)}', space=vmem, size = 0x12000, scoped, tag = 'internal scratch']
  #allocation2 [shape = 'f32[4,128]{1,0:T(4,128)}', space=vmem, size = 0x800, scoped, tag = 'scratch operand']
  #allocation3 [shape = 'f32[1,256]{1,0:T(1,128)}', space=vmem, size = 0x400, scoped, tag = 'scratch operand']
  %s0 = inlined_call_operand.hbm [shape: f32[2,4,256], index: 0, kind: input, shape index: {}]
  %s1 = inlined_call_operand.hbm [shape: s32[2,1,256], index: 1, kind: input, shape index: {}]
  %s2 = inlined_call_operand.hbm [shape: f32[2,1,128], index: 2, kind: output, shape index: {}]
  %s3 = sld [smem:[#allocation0]]
  $region49: #{tpu_custom_call.1} parent=0
    _
  %s5 = ssub.s32 1, %s3
  %s6 = scalar_select 0, %s5, %s3
  $region1: #{tpu_custom_call.1} parent=0
    #allocation4 [shape = 'u8[8192]{0}', space=vmem, size = 0x2000, scoped, tag = 'input window, operand 0']
    #allocation5 [shape = 's32[2]{0}', space=sflag, size = 0x8, scoped, tag = 'scoped memory for tpu_custom_call.1']
    #allocation6 [shape = 's32[2]{0}', space=sflag, size = 0x8, scoped, tag = 'scoped memory for tpu_custom_call.1']
    #allocation7 [shape = 'u8[2048]{0}', space=vmem, size = 0x800, scoped, tag = 'input window, operand 1']
    #allocation8 [shape = 's32[2]{0}', space=sflag, size = 0x8, scoped, tag = 'scoped memory for tpu_custom_call.1']
    #allocation9 [shape = 'u8[1024]{0}', space=vmem, size = 0x400, scoped, tag = 'output window, operand 0']
    %7 = vsyncpa [#allocation5], 0
    %s8 = scalar_lea.sflag [#allocation5], 1
    %9 = vsyncpa %s8, 0
    %10 = vsyncpa [#allocation8], 0
    %s11 = scalar_lea.sflag [#allocation8], 1
    %12 = vsyncpa %s11, 0
    %13 = vsyncpa [#allocation6], 0
    %s14 = scalar_lea.sflag [#allocation6], 1
    %15 = vsyncpa %s14, 0
    loop: start=0, step=1, limit=4
    $region2: #{tpu_custom_call.1} parent=1 // loop_pre_header
      _
    $region3: #{tpu_custom_call.1} parent=1 // loop_header
      %s17 = sphi 0, %s21
      %p18 = scmp.ge.s32.totalorder %s17, 4
      %s27 = sphi 0, %s29
      %s30 = sphi 0, %s27
      %s31 = sphi 0, %s30
      %s47 = sphi 0, %s31
      %s53 = sphi 0, %s55
      %s56 = sphi 0, %s53
      %s57 = sphi 0, %s56
      %s73 = sphi 0, %s57
      %s79 = sphi 0, %s81
      %s82 = sphi 0, %s79
      %s83 = sphi 0, %s82
      %s99 = sphi 0, %s83
    $region4: #{tpu_custom_call.1} parent=1 // loop_header_branch
      %20 = sbr.rel (%p18) target = $region8
    $region5: #{tpu_custom_call.1} parent=1 // loop_body
      %s22 = ssub.s32 %s17, 1
      %s23 = ssub.s32 %s17, 2
      %s24 = sadd.s32 %s17, 1
      %s25 = ssub.s32 %s17, %s24
      %p26 = scmp.eq.s32.totalorder %s25, 0
      %s28 = sadd.s32 %s27, 1
      %s29 = scalar_select %p26, %s27, %s28
      %p32 = pneg %p26
      %p33 = scmp.eq.s32.totalorder %s17, 1
      %p34 = por %p32, %p33
      %p35 = scmp.ne.s32.totalorder %s27, %s30
      %p36 = scmp.eq.s32.totalorder %s17, 0
      %p37 = por %p35, %p36
      %p38 = scmp.ne.s32.totalorder %s27, %s30
      %p39 = scmp.eq.s32.totalorder %s22, 1
      %p40 = por %p38, %p39
      %p41 = scmp.ne.s32.totalorder %s30, %s31
      %p42 = scmp.eq.s32.totalorder %s22, 0
      %p43 = por %p41, %p42
      %p44 = scmp.ne.s32.totalorder %s30, %s31
      %p45 = scmp.eq.s32.totalorder %s23, 1
      %p46 = por %p44, %p45
      %p48 = scmp.ne.s32.totalorder %s31, %s47
      %p49 = scmp.eq.s32.totalorder %s23, 0
      %p50 = por %p48, %p49
      %s51 = ssub.s32 %s17, %s24
      %p52 = scmp.eq.s32.totalorder %s51, 0
      %s54 = sadd.s32 %s53, 1
      %s55 = scalar_select %p52, %s53, %s54
      %p58 = pneg %p52
      %p59 = scmp.eq.s32.totalorder %s17, 1
      %p60 = por %p58, %p59
      %p61 = scmp.ne.s32.totalorder %s53, %s56
      %p62 = scmp.eq.s32.totalorder %s17, 0
      %p63 = por %p61, %p62
      %p64 = scmp.ne.s32.totalorder %s53, %s56
      %p65 = scmp.eq.s32.totalorder %s22, 1
      %p66 = por %p64, %p65
      %p67 = scmp.ne.s32.totalorder %s56, %s57
      %p68 = scmp.eq.s32.totalorder %s22, 0
      %p69 = por %p67, %p68
      %p70 = scmp.ne.s32.totalorder %s56, %s57
      %p71 = scmp.eq.s32.totalorder %s23, 1
      %p72 = por %p70, %p71
      %p74 = scmp.ne.s32.totalorder %s57, %s73
      %p75 = scmp.eq.s32.totalorder %s23, 0
      %p76 = por %p74, %p75
      %s77 = ssub.s32 %s17, %s24
      %p78 = scmp.eq.s32.totalorder %s77, 0
      %s80 = sadd.s32 %s79, 1
      %s81 = scalar_select %p78, %s79, %s80
      %p84 = pneg %p78
      %p85 = scmp.eq.s32.totalorder %s17, 1
      %p86 = por %p84, %p85
      %p87 = scmp.ne.s32.totalorder %s79, %s82
      %p88 = scmp.eq.s32.totalorder %s17, 0
      %p89 = por %p87, %p88
      %p90 = scmp.ne.s32.totalorder %s79, %s82
      %p91 = scmp.eq.s32.totalorder %s22, 1
      %p92 = por %p90, %p91
      %p93 = scmp.ne.s32.totalorder %s82, %s83
      %p94 = scmp.eq.s32.totalorder %s22, 0
      %p95 = por %p93, %p94
      %p96 = scmp.ne.s32.totalorder %s82, %s83
      %p97 = scmp.eq.s32.totalorder %s23, 1
      %p98 = por %p96, %p97
      %p100 = scmp.ne.s32.totalorder %s83, %s99
      %p101 = scmp.eq.s32.totalorder %s23, 0
      %p102 = por %p100, %p101
      %p103 = scmp.le.s32.totalorder 1, %s17
      %p104 = scmp.lt.s32.totalorder %s17, 3
      %p105 = pnand %p103, %p104
      %p106 = pneg %p105
      // Predicated region
      $region9: #{tpu_custom_call.1} parent=5 // pred_check
        _
      $region10: #{tpu_custom_call.1} parent=5 // pred_check_branch
        %108 = sbr.rel (%p105) target = $region12
      $region11: #{tpu_custom_call.1} parent=5 // pred_region
        %s109 = ssub.s32 %s17, 1
      $region12: #{tpu_custom_call.1} parent=5 // pred_fallthru
        _
      %p110 = scmp.lt.s32.totalorder %s17, 2
      // Predicated region
      $region13: #{tpu_custom_call.1} parent=5 // pred_check
        %p111 = pneg %p110
      $region14: #{tpu_custom_call.1} parent=5 // pred_check_branch
        %113 = sbr.rel (%p111) target = $region16
      $region15: #{tpu_custom_call.1} parent=5 // pred_region
        // Predicated region
        $region17: #{tpu_custom_call.1} parent=15 // pred_check
          %p114 = pneg %p37
        $region18: #{tpu_custom_call.1} parent=15 // pred_check_branch
          %116 = sbr.rel (%p114) target = $region20
        $region19: #{tpu_custom_call.1} parent=15 // pred_region
          %s117 = sand.u32 %s27, 1
          %s118 = scalar_lea.sflag [#allocation5], %s117
          %s119 = sand.u32 %s27, 1
          %s120 = smul.addr %s119, 8
          %s121 = scalar_lea.vmem [#allocation4], %s120
          %s123 = ssub.s32 128, 128
          %124 = vsyncadd %s118, %s123
          %s125 = smul.addr %s17, 2
          %s126 = smul.addr %s125, 64
          %s127 = scalar_lea.hbm %s0, %s126
          %s129 = sshll.u32 %s121, 4
          %s130 = int_to_ptr.vmem [resolvable:$true] %s129
          %132 = dma.hbm_to_vmem [thread:$0]  %s127, 128, %s130, %s118
        $region20: #{tpu_custom_call.1} parent=15 // pred_fallthru
          _
        // Predicated region
        $region21: #{tpu_custom_call.1} parent=15 // pred_check
          %p133 = pneg %p63
        $region22: #{tpu_custom_call.1} parent=15 // pred_check_branch
          %135 = sbr.rel (%p133) target = $region24
        $region23: #{tpu_custom_call.1} parent=15 // pred_region
          %s136 = sand.u32 %s53, 1
          %s137 = scalar_lea.sflag [#allocation8], %s136
          %s138 = sand.u32 %s53, 1
          %s139 = smul.addr %s138, 2
          %s140 = scalar_lea.vmem [#allocation7], %s139
          %s142 = ssub.s32 32, 32
          %143 = vsyncadd %s137, %s142
          %s144 = smul.addr %s17, 2
          %s145 = smul.addr %s144, 16
          %s146 = scalar_lea.hbm %s1, %s145
          %s148 = sshll.u32 %s140, 4
          %s149 = int_to_ptr.vmem [resolvable:$true] %s148
          %151 = dma.hbm_to_vmem [thread:$0]  %s146, 32, %s149, %s137
        $region24: #{tpu_custom_call.1} parent=15 // pred_fallthru
          _
      $region16: #{tpu_custom_call.1} parent=5 // pred_fallthru
        _
      %p152 = scmp.le.s32.totalorder 1, %s17
      %p153 = scmp.lt.s32.totalorder %s17, 3
      %p154 = pnand %p152, %p153
      %p155 = pneg %p154
      // Predicated region
      $region25: #{tpu_custom_call.1} parent=5 // pred_check
        _
      $region26: #{tpu_custom_call.1} parent=5 // pred_check_branch
        %157 = sbr.rel (%p154) target = $region28
      $region27: #{tpu_custom_call.1} parent=5 // pred_region
        %s158 = ssub.s32 %s17, 1
        %s159 = sand.u32 %s30, 1
        %s160 = scalar_lea.sflag [#allocation5], %s159
        %s161 = sand.u32 %s30, 1
        %s162 = smul.addr %s161, 8
        %s163 = scalar_lea.vmem [#allocation4], %s162
        // Predicated region
        $region29: #{tpu_custom_call.1} parent=27 // pred_check
          %p164 = pneg %p43
        $region30: #{tpu_custom_call.1} parent=27 // pred_check_branch
          %166 = sbr.rel (%p164) target = $region32
        $region31: #{tpu_custom_call.1} parent=27 // pred_region
          %167 = dma.done %s160, 128
        $region32: #{tpu_custom_call.1} parent=27 // pred_fallthru
          _
        %s168 = sand.u32 %s56, 1
        %s169 = scalar_lea.sflag [#allocation8], %s168
        %s170 = sand.u32 %s56, 1
        %s171 = smul.addr %s170, 2
        %s172 = scalar_lea.vmem [#allocation7], %s171
        // Predicated region
        $region33: #{tpu_custom_call.1} parent=27 // pred_check
          %p173 = pneg %p69
        $region34: #{tpu_custom_call.1} parent=27 // pred_check_branch
          %175 = sbr.rel (%p173) target = $region36
        $region35: #{tpu_custom_call.1} parent=27 // pred_region
          %176 = dma.done %s169, 32
        $region36: #{tpu_custom_call.1} parent=27 // pred_fallthru
          _
        %s177 = sand.u32 %s30, 1
        %s178 = scalar_lea.sflag [#allocation5], %s177
        %s179 = sand.u32 %s30, 1
        %s180 = smul.addr %s179, 8
        %s181 = scalar_lea.vmem [#allocation4], %s180
        %p182 = pneg %p43
        %p183 = pneg %p40
        %s184 = sand.u32 %s56, 1
        %s185 = scalar_lea.sflag [#allocation8], %s184
        %s186 = sand.u32 %s56, 1
        %s187 = smul.addr %s186, 2
        %s188 = scalar_lea.vmem [#allocation7], %s187
        %p189 = pneg %p69
        %p190 = pneg %p66
        %p191 = pneg %p95
        %p192 = pneg %p92
        %s193 = sand.u32 %s82, 1
        %s194 = scalar_lea.sflag [#allocation6], %s193
        %s195 = sand.u32 %s82, 1
        %s196 = scalar_lea.vmem [#allocation9], %s195
        %v197 = vlaneseq
        %v198 = vshrl.u32 %v197, 7
        %v199 = vadd.s32 %v198, 8
        %v200 = vadd.s32 %v198, 16
        %v201 = vadd.s32 %v198, 24
        %v202 = vadd.s32 %v198, 32
        %v203 = vadd.s32 %v198, 40
        %v204 = vadd.s32 %v198, 48
        %v205 = vadd.s32 %v198, 56
        %v206 = vadd.s32 %v198, 64
        %v207 = vadd.s32 %v198, 72
        %v208 = vadd.s32 %v198, 80
        %v209 = vadd.s32 %v198, 88
        %v210 = vadd.s32 %v198, 96
        %v211 = vadd.s32 %v198, 104
        %v212 = vadd.s32 %v198, 112
        %v213 = vadd.s32 %v198, 120
        %214 = vst [vmem:[#allocation2] sm:$0xf] 0.0
        %v215 = vld [vmem:[%s163] sm:$0xff]
        %v217 = vcombine.high %v215, %v215
        %vm219 = vcmask 1043456
        %v220 = vsel %vm219, %v215, -inf
        %v221 = vrot.slane %v220, 4
        %v222 = vmax.f32 %v220, %v221
        %v223 = vrot.slane %v222, 2
        %v224 = vmax.f32 %v222, %v223
        %v225 = vrot.slane %v224, 1
        %v226 = vmax.f32 %v224, %v225
        %v227 = vsel %vm219, %v217, -inf
        %v228 = vrot.slane %v227, 4
        %v229 = vmax.f32 %v227, %v228
        %v230 = vrot.slane %v229, 2
        %v231 = vmax.f32 %v229, %v230
        %v232 = vrot.slane %v231, 1
        %v233 = vmax.f32 %v231, %v232
        %v236 = vcombine.low %v226, %v233
        %v238 = vsub.f32 %v215, %v236
        %v239 = vmul.f32 %v238, 1.442695
        %v240 = vpow.pop %v239
        %v242 = vcombine.high %v240, %v240
        %v244 = vsel %vm219, %v240, 0.0
        %v245 = vrot.slane %v244, 4
        %v246 = vadd.f32 %v244, %v245
        %v247 = vrot.slane %v246, 2
        %v248 = vadd.f32 %v246, %v247
        %v249 = vrot.slane %v248, 1
        %v250 = vadd.f32 %v248, %v249
        %v251 = vsel %vm219, %v242, 0.0
        %v252 = vrot.slane %v251, 4
        %v253 = vadd.f32 %v251, %v252
        %v254 = vrot.slane %v253, 2
        %v255 = vadd.f32 %v253, %v254
        %v256 = vrot.slane %v255, 1
        %v257 = vadd.f32 %v255, %v256
        %v258 = vlog2.pop %v250
        %v259 = vmul.f32 %v258, 0.6931472
        %v260 = vlog2.pop %v257
        %v261 = vmul.f32 %v260, 0.6931472
        %v262 = vadd.f32 %v226, %v259
        %v263 = vadd.f32 %v233, %v261
        %v266 = vcombine.low %v262, %v263
        %v268 = vunpack.c.l.s4 1966171168
        %v269 = vunpack.c.0.s8 %v268
        %v270 = vlaneseq
        %v271 = vshrl.u32 %v270, 7
        %v272 = vsub.s32 %v269, %v271
        %v273 = vrot.slane %v266, %v272
        %v275 = vunpack.c.l.s4 1966171168
        %v276 = vunpack.c.0.s8 %v275
        %v277 = vlaneseq
        %v278 = vshrl.u32 %v277, 7
        %v279 = vsub.s32 %v276, %v278
        %v280 = vrot.slane %v273, %v279
        %v282 = vlaneseq
        %vm283 = vcmp.ge.s32.totalorder %v282, 0
        %vm284 = vcmp.lt.s32.totalorder %v282, 256
        %vm285 = vmand %vm283, %vm284
        %286 = vst.msk [vmem:[#allocation3] sm:$0x3] %vm285, %v280
        %v289 = vcombine.low %v250, %v257
        %v291 = vrcp.pop %v289
        %v292 = vmul.f32 %v240, %v291
        %v293 = vld [vmem:[%s172] sm:$0x3]
        %v294 = vlaneseq
        %v295 = vshrl.u32 %v294, 7
        %v296 = vsub.s32 0, %v295
        %v297 = vrot.slane %v293, %v296
        %v298 = vlaneseq
        %v299 = vshrl.u32 %v298, 7
        %v300 = vsub.s32 1, %v299
        %v301 = vrot.slane %v293, %v300
        %vm302 = vcmp.eq.s32.totalorder %v198, %v297
        %vm303 = vcmp.eq.s32.totalorder %v198, %v301
        %vm304 = vcmp.eq.s32.totalorder %v199, %v297
        %vm305 = vcmp.eq.s32.totalorder %v199, %v301
        %vm306 = vcmp.eq.s32.totalorder %v200, %v297
        %vm307 = vcmp.eq.s32.totalorder %v200, %v301
        %vm308 = vcmp.eq.s32.totalorder %v201, %v297
        %vm309 = vcmp.eq.s32.totalorder %v201, %v301
        %vm310 = vcmp.eq.s32.totalorder %v202, %v297
        %vm311 = vcmp.eq.s32.totalorder %v202, %v301
        %vm312 = vcmp.eq.s32.totalorder %v203, %v297
        %vm313 = vcmp.eq.s32.totalorder %v203, %v301
        %vm314 = vcmp.eq.s32.totalorder %v204, %v297
        %vm315 = vcmp.eq.s32.totalorder %v204, %v301
        %vm316 = vcmp.eq.s32.totalorder %v205, %v297
        %vm317 = vcmp.eq.s32.totalorder %v205, %v301
        %vm318 = vcmp.eq.s32.totalorder %v206, %v297
        %vm319 = vcmp.eq.s32.totalorder %v206, %v301
        %vm320 = vcmp.eq.s32.totalorder %v207, %v297
        %vm321 = vcmp.eq.s32.totalorder %v207, %v301
        %vm322 = vcmp.eq.s32.totalorder %v208, %v297
        %vm323 = vcmp.eq.s32.totalorder %v208, %v301
        %vm324 = vcmp.eq.s32.totalorder %v209, %v297
        %vm325 = vcmp.eq.s32.totalorder %v209, %v301
        %vm326 = vcmp.eq.s32.totalorder %v210, %v297
        %vm327 = vcmp.eq.s32.totalorder %v210, %v301
        %vm328 = vcmp.eq.s32.totalorder %v211, %v297
        %vm329 = vcmp.eq.s32.totalorder %v211, %v301
        %vm330 = vcmp.eq.s32.totalorder %v212, %v297
        %vm331 = vcmp.eq.s32.totalorder %v212, %v301
        %vm332 = vcmp.eq.s32.totalorder %v213, %v297
        %vm333 = vcmp.eq.s32.totalorder %v213, %v301
        %v334 = vsel %vm302, 1, 0
        %v335 = vsel %vm303, 1, 0
        %v336 = vsel %vm304, 1, 0
        %v337 = vsel %vm305, 1, 0
        %v338 = vsel %vm306, 1, 0
        %v339 = vsel %vm307, 1, 0
        %v340 = vsel %vm308, 1, 0
        %v341 = vsel %vm309, 1, 0
        %v342 = vsel %vm310, 1, 0
        %v343 = vsel %vm311, 1, 0
        %v344 = vsel %vm312, 1, 0
        %v345 = vsel %vm313, 1, 0
        %v346 = vsel %vm314, 1, 0
        %v347 = vsel %vm315, 1, 0
        %v348 = vsel %vm316, 1, 0
        %v349 = vsel %vm317, 1, 0
        %v350 = vsel %vm318, 1, 0
        %v351 = vsel %vm319, 1, 0
        %v352 = vsel %vm320, 1, 0
        %v353 = vsel %vm321, 1, 0
        %v354 = vsel %vm322, 1, 0
        %v355 = vsel %vm323, 1, 0
        %v356 = vsel %vm324, 1, 0
        %v357 = vsel %vm325, 1, 0
        %v358 = vsel %vm326, 1, 0
        %v359 = vsel %vm327, 1, 0
        %v360 = vsel %vm328, 1, 0
        %v361 = vsel %vm329, 1, 0
        %v362 = vsel %vm330, 1, 0
        %v363 = vsel %vm331, 1, 0
        %v364 = vsel %vm332, 1, 0
        %v365 = vsel %vm333, 1, 0
        %v366 = vcvt.s32.f32 %v334
        %v367 = vcvt.s32.f32 %v335
        %v368 = vcvt.s32.f32 %v336
        %v369 = vcvt.s32.f32 %v337
        %v370 = vcvt.s32.f32 %v338
        %v371 = vcvt.s32.f32 %v339
        %v372 = vcvt.s32.f32 %v340
        %v373 = vcvt.s32.f32 %v341
        %v374 = vcvt.s32.f32 %v342
        %v375 = vcvt.s32.f32 %v343
        %v376 = vcvt.s32.f32 %v344
        %v377 = vcvt.s32.f32 %v345
        %v378 = vcvt.s32.f32 %v346
        %v379 = vcvt.s32.f32 %v347
        %v380 = vcvt.s32.f32 %v348
        %v381 = vcvt.s32.f32 %v349
        %v382 = vcvt.s32.f32 %v350
        %v383 = vcvt.s32.f32 %v351
        %v384 = vcvt.s32.f32 %v352
        %v385 = vcvt.s32.f32 %v353
        %v386 = vcvt.s32.f32 %v354
        %v387 = vcvt.s32.f32 %v355
        %v388 = vcvt.s32.f32 %v356
        %v389 = vcvt.s32.f32 %v357
        %v390 = vcvt.s32.f32 %v358
        %v391 = vcvt.s32.f32 %v359
        %v392 = vcvt.s32.f32 %v360
        %v393 = vcvt.s32.f32 %v361
        %v394 = vcvt.s32.f32 %v362
        %v395 = vcvt.s32.f32 %v363
        %v396 = vcvt.s32.f32 %v364
        %v397 = vcvt.s32.f32 %v365
        %v398 = vld [vmem:[#allocation2] sm:$0xf]
        %v400 = vcombine.high %v292, %v292
        %402 = vmatprep.subr.mxu0 %v367
        %403 = vmatpush1.xpose.msra.mxu0 %v366
        %404 = vmatprep.subr.mxu0 %v369
        %405 = vmatpush1.xpose.msra.mxu0 %v368
        %406 = vmatprep.subr.mxu0 %v371
        %407 = vmatpush1.xpose.msra.mxu0 %v370
        %408 = vmatprep.subr.mxu0 %v373
        %409 = vmatpush1.xpose.msra.mxu0 %v372
        %410 = vmatprep.subr.mxu0 %v375
        %411 = vmatpush1.xpose.msra.mxu0 %v374
        %412 = vmatprep.subr.mxu0 %v377
        %413 = vmatpush1.xpose.msra.mxu0 %v376
        %414 = vmatprep.subr.mxu0 %v379
        %415 = vmatpush1.xpose.msra.mxu0 %v378
        %416 = vmatprep.subr.mxu0 %v381
        %417 = vmatpush1.xpose.msra.mxu0 %v380
        %418 = vmatprep.subr.mxu0 %v383
        %419 = vmatpush1.xpose.msra.mxu0 %v382
        %420 = vmatprep.subr.mxu0 %v385
        %421 = vmatpush1.xpose.msra.mxu0 %v384
        %422 = vmatprep.subr.mxu0 %v387
        %423 = vmatpush1.xpose.msra.mxu0 %v386
        %424 = vmatprep.subr.mxu0 %v389
        %425 = vmatpush1.xpose.msra.mxu0 %v388
        %426 = vmatprep.subr.mxu0 %v391
        %427 = vmatpush1.xpose.msra.mxu0 %v390
        %428 = vmatprep.subr.mxu0 %v393
        %429 = vmatpush1.xpose.msra.mxu0 %v392
        %430 = vmatprep.subr.mxu0 %v395
        %431 = vmatpush1.xpose.msra.mxu0 %v394
        %432 = vmatprep.subr.mxu0 %v397
        %433 = vmatpush1.xpose.msra.mxu0 %v396
        %434 = vmatprep.subr.mxu0 0.0
        %435 = vmatpush1.xpose.msra.mxu0 0.0
        %436 = vmatprep.subr.mxu0 0.0
        %437 = vmatpush1.xpose.msra.mxu0 0.0
        %438 = vmatprep.subr.mxu0 0.0
        %439 = vmatpush1.xpose.msra.mxu0 0.0
        %440 = vmatprep.subr.mxu0 0.0
        %441 = vmatpush1.xpose.msra.mxu0 0.0
        %442 = vmatprep.subr.mxu0 0.0
        %443 = vmatpush1.xpose.msra.mxu0 0.0
        %444 = vmatprep.subr.mxu0 0.0
        %445 = vmatpush1.xpose.msra.mxu0 0.0
        %446 = vmatprep.subr.mxu0 0.0
        %447 = vmatpush1.xpose.msra.mxu0 0.0
        %448 = vmatprep.subr.mxu0 0.0
        %449 = vmatpush1.xpose.msra.mxu0 0.0
        %450 = vmatprep.subr.mxu0 0.0
        %451 = vmatpush1.xpose.msra.mxu0 0.0
        %452 = vmatprep.subr.mxu0 0.0
        %453 = vmatpush1.xpose.msra.mxu0 0.0
        %454 = vmatprep.subr.mxu0 0.0
        %455 = vmatpush1.xpose.msra.mxu0 0.0
        %456 = vmatprep.subr.mxu0 0.0
        %457 = vmatpush1.xpose.msra.mxu0 0.0
        %458 = vmatprep.subr.mxu0 0.0
        %459 = vmatpush1.xpose.msra.mxu0 0.0
        %460 = vmatprep.subr.mxu0 0.0
        %461 = vmatpush1.xpose.msra.mxu0 0.0
        %462 = vmatprep.subr.mxu0 0.0
        %463 = vmatpush1.xpose.msra.mxu0 0.0
        %464 = vmatprep.subr.mxu0 0.0
        %465 = vmatpush1.xpose.msra.mxu0 0.0
        %466 = vmatprep.mubr.f32.mxu0 %v400
        %467 = vmatmul.mubr.f32.gmra.mrb[0].mxu0 %v292
        %v468 = vpop.f32.mrb[0].mxu0
        %v469 = vadd.f32 0.0, %v468
        %v470 = vpop.f32.mrb[0].mxu0
        %471 = vdwg.mxu0
        %v472 = vadd.f32 %v398, %v469
        %473 = vst [vmem:[#allocation2] sm:$0xf] %v472
        %v474 = vld [vmem:[#allocation2] sm:$0xf]
        %v475 = vsel %vm219, %v474, 0.0
        %v476 = vrot.slane %v475, 4
        %v477 = vadd.f32 %v475, %v476
        %v478 = vrot.slane %v477, 2
        %v479 = vadd.f32 %v477, %v478
        %v480 = vrot.slane %v479, 1
        %v481 = vadd.f32 %v479, %v480
        %v482 = vmax.f32 %v481, 1.0
        %v483 = vrcp.pop %v482
        %v484 = vmul.f32 %v474, %v483
        %v485 = vld [vmem:[%s163] sm:$0xff]
        %v486 = vld [vmem:[#allocation3] sm:$0x3]
        %v488 = vlaneseq
        %v489 = vshrl.u32 %v488, 7
        %v490 = vsub.s32 0, %v489
        %v491 = vrot.slane %v486, %v490
        %v492 = vlaneseq
        %v493 = vshrl.u32 %v492, 7
        %v494 = vsub.s32 1, %v493
        %v495 = vrot.slane %v486, %v494
        %v496 = vcombine.low %v491, %v495
        %v498 = vsub.f32 %v485, %v496
        %v499 = vmul.f32 %v498, 1.442695
        %v500 = vpow.pop %v499
        %v501 = vld [vmem:[%s172] sm:$0x3]
        %v502 = vlaneseq
        %v503 = vshrl.u32 %v502, 7
        %v504 = vsub.s32 0, %v503
        %v505 = vrot.slane %v501, %v504
        %v506 = vlaneseq
        %v507 = vshrl.u32 %v506, 7
        %v508 = vsub.s32 1, %v507
        %v509 = vrot.slane %v501, %v508
        %vm510 = vcmp.eq.s32.totalorder %v198, %v505
        %vm511 = vcmp.eq.s32.totalorder %v198, %v509
        %vm512 = vcmp.eq.s32.totalorder %v199, %v505
        %vm513 = vcmp.eq.s32.totalorder %v199, %v509
        %vm514 = vcmp.eq.s32.totalorder %v200, %v505
        %vm515 = vcmp.eq.s32.totalorder %v200, %v509
        %vm516 = vcmp.eq.s32.totalorder %v201, %v505
        %vm517 = vcmp.eq.s32.totalorder %v201, %v509
        %vm518 = vcmp.eq.s32.totalorder %v202, %v505
        %vm519 = vcmp.eq.s32.totalorder %v202, %v509
        %vm520 = vcmp.eq.s32.totalorder %v203, %v505
        %vm521 = vcmp.eq.s32.totalorder %v203, %v509
        %vm522 = vcmp.eq.s32.totalorder %v204, %v505
        %vm523 = vcmp.eq.s32.totalorder %v204, %v509
        %vm524 = vcmp.eq.s32.totalorder %v205, %v505
        %vm525 = vcmp.eq.s32.totalorder %v205, %v509
        %vm526 = vcmp.eq.s32.totalorder %v206, %v505
        %vm527 = vcmp.eq.s32.totalorder %v206, %v509
        %vm528 = vcmp.eq.s32.totalorder %v207, %v505
        %vm529 = vcmp.eq.s32.totalorder %v207, %v509
        %vm530 = vcmp.eq.s32.totalorder %v208, %v505
        %vm531 = vcmp.eq.s32.totalorder %v208, %v509
        %vm532 = vcmp.eq.s32.totalorder %v209, %v505
        %vm533 = vcmp.eq.s32.totalorder %v209, %v509
        %vm534 = vcmp.eq.s32.totalorder %v210, %v505
        %vm535 = vcmp.eq.s32.totalorder %v210, %v509
        %vm536 = vcmp.eq.s32.totalorder %v211, %v505
        %vm537 = vcmp.eq.s32.totalorder %v211, %v509
        %vm538 = vcmp.eq.s32.totalorder %v212, %v505
        %vm539 = vcmp.eq.s32.totalorder %v212, %v509
        %vm540 = vcmp.eq.s32.totalorder %v213, %v505
        %vm541 = vcmp.eq.s32.totalorder %v213, %v509
        %v542 = vsel %vm510, 1, 0
        %v543 = vsel %vm511, 1, 0
        %v544 = vsel %vm512, 1, 0
        %v545 = vsel %vm513, 1, 0
        %v546 = vsel %vm514, 1, 0
        %v547 = vsel %vm515, 1, 0
        %v548 = vsel %vm516, 1, 0
        %v549 = vsel %vm517, 1, 0
        %v550 = vsel %vm518, 1, 0
        %v551 = vsel %vm519, 1, 0
        %v552 = vsel %vm520, 1, 0
        %v553 = vsel %vm521, 1, 0
        %v554 = vsel %vm522, 1, 0
        %v555 = vsel %vm523, 1, 0
        %v556 = vsel %vm524, 1, 0
        %v557 = vsel %vm525, 1, 0
        %v558 = vsel %vm526, 1, 0
        %v559 = vsel %vm527, 1, 0
        %v560 = vsel %vm528, 1, 0
        %v561 = vsel %vm529, 1, 0
        %v562 = vsel %vm530, 1, 0
        %v563 = vsel %vm531, 1, 0
        %v564 = vsel %vm532, 1, 0
        %v565 = vsel %vm533, 1, 0
        %v566 = vsel %vm534, 1, 0
        %v567 = vsel %vm535, 1, 0
        %v568 = vsel %vm536, 1, 0
        %v569 = vsel %vm537, 1, 0
        %v570 = vsel %vm538, 1, 0
        %v571 = vsel %vm539, 1, 0
        %v572 = vsel %vm540, 1, 0
        %v573 = vsel %vm541, 1, 0
        %v574 = vcvt.s32.f32 %v542
        %v575 = vcvt.s32.f32 %v543
        %v576 = vcvt.s32.f32 %v544
        %v577 = vcvt.s32.f32 %v545
        %v578 = vcvt.s32.f32 %v546
        %v579 = vcvt.s32.f32 %v547
        %v580 = vcvt.s32.f32 %v548
        %v581 = vcvt.s32.f32 %v549
        %v582 = vcvt.s32.f32 %v550
        %v583 = vcvt.s32.f32 %v551
        %v584 = vcvt.s32.f32 %v552
        %v585 = vcvt.s32.f32 %v553
        %v586 = vcvt.s32.f32 %v554
        %v587 = vcvt.s32.f32 %v555
        %v588 = vcvt.s32.f32 %v556
        %v589 = vcvt.s32.f32 %v557
        %v590 = vcvt.s32.f32 %v558
        %v591 = vcvt.s32.f32 %v559
        %v592 = vcvt.s32.f32 %v560
        %v593 = vcvt.s32.f32 %v561
        %v594 = vcvt.s32.f32 %v562
        %v595 = vcvt.s32.f32 %v563
        %v596 = vcvt.s32.f32 %v564
        %v597 = vcvt.s32.f32 %v565
        %v598 = vcvt.s32.f32 %v566
        %v599 = vcvt.s32.f32 %v567
        %v600 = vcvt.s32.f32 %v568
        %v601 = vcvt.s32.f32 %v569
        %v602 = vcvt.s32.f32 %v570
        %v603 = vcvt.s32.f32 %v571
        %v604 = vcvt.s32.f32 %v572
        %v605 = vcvt.s32.f32 %v573
        %606 = vmatprep.subr.mxu0 %v575
        %607 = vmatpush1.msra.mxu0 %v574
        %608 = vmatprep.subr.mxu0 %v577
        %609 = vmatpush1.msra.mxu0 %v576
        %610 = vmatprep.subr.mxu0 %v579
        %611 = vmatpush1.msra.mxu0 %v578
        %612 = vmatprep.subr.mxu0 %v581
        %613 = vmatpush1.msra.mxu0 %v580
        %614 = vmatprep.subr.mxu0 %v583
        %615 = vmatpush1.msra.mxu0 %v582
        %616 = vmatprep.subr.mxu0 %v585
        %617 = vmatpush1.msra.mxu0 %v584
        %618 = vmatprep.subr.mxu0 %v587
        %619 = vmatpush1.msra.mxu0 %v586
        %620 = vmatprep.subr.mxu0 %v589
        %621 = vmatpush1.msra.mxu0 %v588
        %622 = vmatprep.subr.mxu0 %v591
        %623 = vmatpush1.msra.mxu0 %v590
        %624 = vmatprep.subr.mxu0 %v593
        %625 = vmatpush1.msra.mxu0 %v592
        %626 = vmatprep.subr.mxu0 %v595
        %627 = vmatpush1.msra.mxu0 %v594
        %628 = vmatprep.subr.mxu0 %v597
        %629 = vmatpush1.msra.mxu0 %v596
        %630 = vmatprep.subr.mxu0 %v599
        %631 = vmatpush1.msra.mxu0 %v598
        %632 = vmatprep.subr.mxu0 %v601
        %633 = vmatpush1.msra.mxu0 %v600
        %634 = vmatprep.subr.mxu0 %v603
        %635 = vmatpush1.msra.mxu0 %v602
        %636 = vmatprep.subr.mxu0 %v605
        %637 = vmatpush1.msra.mxu0 %v604
        %638 = vmatprep.subr.mxu0 0.0
        %639 = vmatpush1.msra.mxu0 0.0
        %640 = vmatprep.subr.mxu0 0.0
        %641 = vmatpush1.msra.mxu0 0.0
        %642 = vmatprep.subr.mxu0 0.0
        %643 = vmatpush1.msra.mxu0 0.0
        %644 = vmatprep.subr.mxu0 0.0
        %645 = vmatpush1.msra.mxu0 0.0
        %646 = vmatprep.subr.mxu0 0.0
        %647 = vmatpush1.msra.mxu0 0.0
        %648 = vmatprep.subr.mxu0 0.0
        %649 = vmatpush1.msra.mxu0 0.0
        %650 = vmatprep.subr.mxu0 0.0
        %651 = vmatpush1.msra.mxu0 0.0
        %652 = vmatprep.subr.mxu0 0.0
        %653 = vmatpush1.msra.mxu0 0.0
        %654 = vmatprep.subr.mxu0 0.0
        %655 = vmatpush1.msra.mxu0 0.0
        %656 = vmatprep.subr.mxu0 0.0
        %657 = vmatpush1.msra.mxu0 0.0
        %658 = vmatprep.subr.mxu0 0.0
        %659 = vmatpush1.msra.mxu0 0.0
        %660 = vmatprep.subr.mxu0 0.0
        %661 = vmatpush1.msra.mxu0 0.0
        %662 = vmatprep.subr.mxu0 0.0
        %663 = vmatpush1.msra.mxu0 0.0
        %664 = vmatprep.subr.mxu0 0.0
        %665 = vmatpush1.msra.mxu0 0.0
        %666 = vmatprep.subr.mxu0 0.0
        %667 = vmatpush1.msra.mxu0 0.0
        %668 = vmatprep.subr.mxu0 0.0
        %669 = vmatpush1.msra.mxu0 0.0
        %670 = vmatprep.mubr.f32.mxu0 0.0
        %671 = vmatmul.mubr.f32.gmra.mrb[0].mxu0 %v484
        %v672 = vpop.f32.mrb[0].mxu0
        %v673 = vadd.f32 0.0, %v672
        %v674 = vpop.f32.mrb[0].mxu0
        %v675 = vadd.f32 0.0, %v674
        %676 = vdwg.mxu0
        %v679 = vcombine.low %v673, %v675
        %v681 = vsub.f32 %v500, %v679
        %v682 = vand.u32 2147483647, %v681
        %v684 = vcombine.high %v682, %v682
        %v686 = vsel %vm219, %v682, 0.0
        %v687 = vrot.slane %v686, 4
        %v688 = vadd.f32 %v686, %v687
        %v689 = vrot.slane %v688, 2
        %v690 = vadd.f32 %v688, %v689
        %v691 = vrot.slane %v690, 1
        %v692 = vadd.f32 %v690, %v691
        %v693 = vsel %vm219, %v684, 0.0
        %v694 = vrot.slane %v693, 4
        %v695 = vadd.f32 %v693, %v694
        %v696 = vrot.slane %v695, 2
        %v697 = vadd.f32 %v695, %v696
        %v698 = vrot.slane %v697, 1
        %v699 = vadd.f32 %v697, %v698
        %v700 = vsub.f32 %v692, 0.1
        %v701 = vsub.f32 %v699, 0.1
        %v702 = vmax.f32 %v700, 0.0
        %v703 = vmax.f32 %v701, 0.0
        %vm704 = vcmp.ne.s32.totalorder %v501, 0
        %vm705 = vcmp.ne.s32.totalorder %v501, 127
        %vm706 = vmand %vm704, %vm705
        %v707 = vsel %vm706, 1, 0
        %v708 = vcvt.s32.f32 %v707
        %v710 = vlaneseq
        %v711 = vshrl.u32 %v710, 7
        %v712 = vsub.s32 0, %v711
        %v713 = vrot.slane %v708, %v712
        %v714 = vlaneseq
        %v715 = vshrl.u32 %v714, 7
        %v716 = vsub.s32 1, %v715
        %v717 = vrot.slane %v708, %v716
        %v720 = vmul.f32 %v702, %v713
        %v721 = vmul.f32 %v703, %v717
        %v722 = vadd.f32 %v720, 0.0
        %v723 = vadd.f32 %v721, 0.0
        %v724 = vadd.f32 %v708, 0.0
        %vm725 = vcmask 1040384
        %v726 = vsel %vm725, %v722, 0.0
        %v727 = vsel %vm725, %v723, 0.0
        %v728 = vadd.f32 %v726, %v727
        %729 = vadd.xlane.f32.xlu0 %v728
        %v730 = vpop.xlane.xlu0 %729
        %v731 = vrot.slane %v730, 4
        %v732 = vadd.f32 %v730, %v731
        %v733 = vrot.slane %v732, 2
        %v734 = vadd.f32 %v732, %v733
        %v735 = vrot.slane %v734, 1
        %v736 = vadd.f32 %v734, %v735
        %s737 = vtos %v736
        %v739 = vlaneseq
        %v740 = vshrl.u32 %v739, 7
        %v741 = vsub.s32 0, %v740
        %v742 = vrot.slane %v724, %v741
        %v743 = vlaneseq
        %v744 = vshrl.u32 %v743, 7
        %v745 = vsub.s32 1, %v744
        %v746 = vrot.slane %v724, %v745
        %v749 = vsel %vm725, %v742, 0.0
        %v750 = vsel %vm725, %v746, 0.0
        %v751 = vadd.f32 %v749, %v750
        %752 = vadd.xlane.f32.xlu0 %v751
        %v753 = vpop.xlane.xlu0 %752
        %v754 = vrot.slane %v753, 4
        %v755 = vadd.f32 %v753, %v754
        %v756 = vrot.slane %v755, 2
        %v757 = vadd.f32 %v755, %v756
        %v758 = vrot.slane %v757, 1
        %v759 = vadd.f32 %v757, %v758
        %s760 = vtos %v759
        %s761 = sadd.f32 %s760, 1e-05
        %v762 = vstv %s761
        %v763 = vrcp.pop %v762
        %s764 = vtos %v763
        %s765 = smul.f32 %s737, %s764
        %v766 = vstv %s765
        %767 = vst [vmem:[%s196] sm:$0x1] %v766
        %s768 = sand.u32 %s82, 1
        %s769 = scalar_lea.sflag [#allocation6], %s768
        %s770 = sand.u32 %s82, 1
        %s771 = scalar_lea.vmem [#allocation9], %s770
        // Predicated region
        $region37: #{tpu_custom_call.1} parent=27 // pred_check
          %p772 = pneg %p92
        $region38: #{tpu_custom_call.1} parent=27 // pred_check_branch
          %774 = sbr.rel (%p772) target = $region40
        $region39: #{tpu_custom_call.1} parent=27 // pred_region
          %s776 = ssub.s32 16, 16
          %777 = vsyncadd %s769, %s776
          %s778 = smul.addr %s22, 16
          %s779 = scalar_lea.hbm %s2, %s778
          %s781 = sshll.u32 %s771, 4
          %s782 = int_to_ptr.vmem [resolvable:$true] %s781
          %784 = dma.vmem_to_hbm [thread:$0]  %s782, 16, %s779, %s769
        $region40: #{tpu_custom_call.1} parent=27 // pred_fallthru
          _
      $region28: #{tpu_custom_call.1} parent=5 // pred_fallthru
        _
      %p785 = scmp.le.s32.totalorder 2, %s17
      // Predicated region
      $region41: #{tpu_custom_call.1} parent=5 // pred_check
        %p786 = pneg %p785
      $region42: #{tpu_custom_call.1} parent=5 // pred_check_branch
        %788 = sbr.rel (%p786) target = $region44
      $region43: #{tpu_custom_call.1} parent=5 // pred_region
        %s789 = ssub.s32 %s17, 2
        // Predicated region
        $region45: #{tpu_custom_call.1} parent=43 // pred_check
          %p790 = pneg %p98
        $region46: #{tpu_custom_call.1} parent=43 // pred_check_branch
          %792 = sbr.rel (%p790) target = $region48
        $region47: #{tpu_custom_call.1} parent=43 // pred_region
          %s793 = sand.u32 %s83, 1
          %s794 = scalar_lea.sflag [#allocation6], %s793
          %s795 = sand.u32 %s83, 1
          %s796 = scalar_lea.vmem [#allocation9], %s795
          %797 = dma.done %s794, 16
        $region48: #{tpu_custom_call.1} parent=43 // pred_fallthru
          _
      $region44: #{tpu_custom_call.1} parent=5 // pred_fallthru
        _
    $region6: #{tpu_custom_call.1} parent=1 // loop_footer
      %s21 = sadd.s32 1, %s17
    $region7: #{tpu_custom_call.1} parent=1 // loop_footer_branch
      %16 = sbr.rel target = $region3
    $region8: #{tpu_custom_call.1} parent=1 // loop_exit
      _
    %798 = vsyncpa [#allocation5], 1
    %s799 = scalar_lea.sflag [#allocation5], 1
    %800 = vsyncpa %s799, 1
    %801 = vsyncpa [#allocation8], 1
    %s802 = scalar_lea.sflag [#allocation8], 1
    %803 = vsyncpa %s802, 1
    %804 = vsyncpa [#allocation6], 1
    %s805 = scalar_lea.sflag [#allocation6], 1
    %806 = vsyncpa %s805, 1

</llo_original>
